<compile_context>
chip_gen: v6e
topology: v6e:2x2x1
jax: 0.10.0
libtpu: 0.0.40
codegen_flags: <defaults>
</compile_context>

<pallas_src>
import functools

import jax
import jax.numpy as jnp
from jax.experimental import pallas as pl
from jax.experimental.pallas import tpu as pltpu


def actor_kernel(x_ref, w0_ref, b0_ref, w1_ref, b1_ref, w2_ref, b2_ref, o_ref):
    # Layer 0: Linear(state_size -> hidden) + ReLU   (bf16 MXU, f32 accumulate)
    h = jnp.dot(x_ref[...], w0_ref[...], preferred_element_type=jnp.float32)
    h = jnp.maximum(h + b0_ref[...], 0.0)
    # Layer 1: Linear(hidden -> hidden1) + ReLU      (bf16 MXU, f32 accumulate)
    h = jnp.dot(h.astype(w1_ref.dtype), w1_ref[...],
                preferred_element_type=jnp.float32)
    h = jnp.maximum(h + b1_ref[...], 0.0)
    # Layer 2: Linear(hidden1 -> action_size_padded) + tanh (f32: tiny weights)
    a = jnp.dot(h, w2_ref[...], preferred_element_type=jnp.float32)
    o_ref[...] = jnp.tanh(a + b2_ref[...]).astype(o_ref.dtype)


def _round_up(x, m):
    return ((x + m - 1) // m) * m


@functools.partial(jax.jit, static_argnames=("tile_b",))
def actor_forward(state, params, *, tile_b=256):
    """state: (B, state_size) f32. params: dict of (in,out) weights + (1,out) biases."""
    w0, b0 = params["w0"], params["b0"]
    w1, b1 = params["w1"], params["b1"]
    w2, b2 = params["w2"], params["b2"]

    B, state_size = state.shape
    action_size = w2.shape[1]

    # --- lane-dense output: pad the final layer's out-dim to a multiple of 128.
    out_pad = _round_up(max(action_size, 128), 128)
    w2p = jnp.pad(w2, ((0, 0), (0, out_pad - action_size)))
    b2p = jnp.pad(b2, ((0, 0), (0, out_pad - action_size)))

    # --- batch tiling: >=256-row tiles fill the MXU on v6e/v7x; small batches
    #     just round up to the 8-row sublane granularity (single grid step).
    tb = tile_b if B >= tile_b else _round_up(B, 8)
    b_pad = _round_up(B, tb)
    x = state if b_pad == B else jnp.pad(state, ((0, b_pad - B), (0, 0)))

    # --- bf16 on the matmul path (halves HBM bytes for the state stream too).
    x = x.astype(jnp.bfloat16)
    w0b = w0.astype(jnp.bfloat16)
    w1b = w1.astype(jnp.bfloat16)

    resident = lambda i: (0, 0)  # weights/biases: same block every step -> stay in VMEM
    out = pl.pallas_call(
        actor_kernel,
        out_shape=jax.ShapeDtypeStruct((b_pad, out_pad), jnp.float32),
        grid=(b_pad // tb,),
        in_specs=[
            pl.BlockSpec((tb, state_size), lambda i: (i, 0)),  # state tile (pipelined)
            pl.BlockSpec(w0b.shape, resident),
            pl.BlockSpec(b0.shape, resident),
            pl.BlockSpec(w1b.shape, resident),
            pl.BlockSpec(b1.shape, resident),
            pl.BlockSpec(w2p.shape, resident),
            pl.BlockSpec(b2p.shape, resident),
        ],
        out_specs=pl.BlockSpec((tb, out_pad), lambda i: (i, 0)),
        compiler_params=pltpu.CompilerParams(
            dimension_semantics=("parallel",),  # shard batch tiles across v7x's 2 TCs
        ),
    )(x, w0b, b0, w1b, b1, w2p, b2p)

    return out[:B, :action_size]


def init_actor_params(key, state_size, action_size,
                      hidden_layer=32, hidden_layer1=32, w_init=0.003):
    """Deterministic init mirroring nn.Linear defaults (U(-1/sqrt(fan_in), +)),
    with the final layer re-initialized to U(-w_init, w_init) as in the module."""
    k = jax.random.split(key, 6)

    def uniform(key, shape, bound):
        return jax.random.uniform(key, shape, jnp.float32, -bound, bound)

    b_lin = 1.0 / jnp.sqrt(state_size)
    b_lin1 = 1.0 / jnp.sqrt(hidden_layer)
    return {
        # stored as (in, out) == PyTorch weight.T
        "w0": uniform(k[0], (state_size, hidden_layer), b_lin),
        "b0": uniform(k[1], (1, hidden_layer), b_lin),
        "w1": uniform(k[2], (hidden_layer, hidden_layer1), b_lin1),
        "b1": uniform(k[3], (1, hidden_layer1), b_lin1),
        "w2": uniform(k[4], (hidden_layer1, action_size), w_init),
        "b2": uniform(k[5], (1, action_size), w_init),
    }


def actor_reference(state, p):
    h = jnp.maximum(state @ p["w0"] + p["b0"], 0.0)
    h = jnp.maximum(h @ p["w1"] + p["b1"], 0.0)
    return jnp.tanh(h @ p["w2"] + p["b2"])


if __name__ == "__main__":
    key = jax.random.PRNGKey(0)
    k_param, k_state = jax.random.split(key)

    batch = 2
    state_size = 16
    hidden_layer = 32
    hidden_layer1 = 32
    action_size = 8

    params = init_actor_params(k_param, state_size, action_size,
                               hidden_layer, hidden_layer1)
    state = jax.random.normal(k_state, (batch, state_size), jnp.float32)

    out = actor_forward(state, params)
    out = jax.block_until_ready(out)

    ref = actor_reference(state, params)
    assert out.shape == (batch, action_size)
    # bf16 matmul path (f32 accumulate) -> loosened tolerance vs. the f32 reference.
    assert jnp.allclose(out, ref, atol=3e-2, rtol=3e-2), (
        f"max abs diff = {jnp.max(jnp.abs(out - ref))}")

    print("KERNEL_OK")
</pallas_src>

<mosaic_0001>
module attributes {stable_mosaic.version = 11 : i64} {
  func.func @actor_kernel(%arg0: i32, %arg1: memref<8x16xbf16, #tpu.memory_space<vmem>>, %arg2: memref<16x32xbf16, #tpu.memory_space<vmem>>, %arg3: memref<1x32xf32, #tpu.memory_space<vmem>>, %arg4: memref<32x32xbf16, #tpu.memory_space<vmem>>, %arg5: memref<1x32xf32, #tpu.memory_space<vmem>>, %arg6: memref<32x128xf32, #tpu.memory_space<vmem>>, %arg7: memref<1x128xf32, #tpu.memory_space<vmem>>, %arg8: memref<8x128xf32, #tpu.memory_space<vmem>>) attributes {dimension_semantics = [#tpu.dimension_semantics<parallel>], iteration_bounds = array<i64: 1>, scalar_prefetch = 0 : i64, scratch_operands = 0 : i64, tpu.core_type = #tpu.core_type<tc>, window_params = [{transform_indices = @transform_0, window_bounds = array<i64: 8, 16>}, {pipeline_mode = #tpu.pipeline_mode<synchronous>, transform_indices = @transform_1, window_bounds = array<i64: 16, 32>}, {pipeline_mode = #tpu.pipeline_mode<synchronous>, transform_indices = @transform_2, window_bounds = array<i64: 1, 32>}, {pipeline_mode = #tpu.pipeline_mode<synchronous>, transform_indices = @transform_3, window_bounds = array<i64: 32, 32>}, {pipeline_mode = #tpu.pipeline_mode<synchronous>, transform_indices = @transform_4, window_bounds = array<i64: 1, 32>}, {pipeline_mode = #tpu.pipeline_mode<synchronous>, transform_indices = @transform_5, window_bounds = array<i64: 32, 128>}, {pipeline_mode = #tpu.pipeline_mode<synchronous>, transform_indices = @transform_6, window_bounds = array<i64: 1, 128>}, {transform_indices = @transform_7, window_bounds = array<i64: 8, 128>}]} {
    %c0 = arith.constant 0 : index
    %c0_0 = arith.constant 0 : index
    %0 = vector.load %arg1[%c0, %c0_0] : memref<8x16xbf16, #tpu.memory_space<vmem>>, vector<8x16xbf16>
    %c0_1 = arith.constant 0 : index
    %c0_2 = arith.constant 0 : index
    %1 = vector.load %arg2[%c0_1, %c0_2] : memref<16x32xbf16, #tpu.memory_space<vmem>>, vector<16x32xbf16>
    %cst = arith.constant dense<0.000000e+00> : vector<8x32xf32>
    %2 = tpu.matmul %0, %1, %cst {dimension_numbers = #tpu.dot_dimension_numbers<[1], [0], [0], [1], [0, 0, 1, 1], [], []>} : vector<8x16xbf16>, vector<16x32xbf16>, vector<8x32xf32> -> vector<8x32xf32>
    %c0_3 = arith.constant 0 : index
    %c0_4 = arith.constant 0 : index
    %3 = vector.load %arg3[%c0_3, %c0_4] : memref<1x32xf32, #tpu.memory_space<vmem>>, vector<1x32xf32>
    %4 = vector.broadcast %3 : vector<1x32xf32> to vector<8x32xf32>
    %5 = arith.addf %2, %4 : vector<8x32xf32>
    %cst_5 = arith.constant 0.000000e+00 : f32
    %6 = vector.broadcast %cst_5 : f32 to vector<8x32xf32>
    %7 = arith.maximumf %5, %6 : vector<8x32xf32>
    %8 = arith.truncf %7 : vector<8x32xf32> to vector<8x32xbf16>
    %c0_6 = arith.constant 0 : index
    %c0_7 = arith.constant 0 : index
    %9 = vector.load %arg4[%c0_6, %c0_7] : memref<32x32xbf16, #tpu.memory_space<vmem>>, vector<32x32xbf16>
    %cst_8 = arith.constant dense<0.000000e+00> : vector<8x32xf32>
    %10 = tpu.matmul %8, %9, %cst_8 {dimension_numbers = #tpu.dot_dimension_numbers<[1], [0], [0], [1], [0, 0, 1, 1], [], []>} : vector<8x32xbf16>, vector<32x32xbf16>, vector<8x32xf32> -> vector<8x32xf32>
    %c0_9 = arith.constant 0 : index
    %c0_10 = arith.constant 0 : index
    %11 = vector.load %arg5[%c0_9, %c0_10] : memref<1x32xf32, #tpu.memory_space<vmem>>, vector<1x32xf32>
    %12 = vector.broadcast %11 : vector<1x32xf32> to vector<8x32xf32>
    %13 = arith.addf %10, %12 : vector<8x32xf32>
    %cst_11 = arith.constant 0.000000e+00 : f32
    %14 = vector.broadcast %cst_11 : f32 to vector<8x32xf32>
    %15 = arith.maximumf %13, %14 : vector<8x32xf32>
    %c0_12 = arith.constant 0 : index
    %c0_13 = arith.constant 0 : index
    %16 = vector.load %arg6[%c0_12, %c0_13] : memref<32x128xf32, #tpu.memory_space<vmem>>, vector<32x128xf32>
    %cst_14 = arith.constant dense<0.000000e+00> : vector<8x128xf32>
    %17 = tpu.matmul %15, %16, %cst_14 {dimension_numbers = #tpu.dot_dimension_numbers<[1], [0], [0], [1], [0, 0, 1, 1], [], []>} : vector<8x32xf32>, vector<32x128xf32>, vector<8x128xf32> -> vector<8x128xf32>
    %c0_15 = arith.constant 0 : index
    %c0_16 = arith.constant 0 : index
    %18 = vector.load %arg7[%c0_15, %c0_16] : memref<1x128xf32, #tpu.memory_space<vmem>>, vector<1x128xf32>
    %19 = vector.broadcast %18 : vector<1x128xf32> to vector<8x128xf32>
    %20 = arith.addf %17, %19 : vector<8x128xf32>
    %21 = math.tanh %20 : vector<8x128xf32>
    %c0_17 = arith.constant 0 : index
    %c0_18 = arith.constant 0 : index
    %22 = vector.load %arg8[%c0_17, %c0_18] : memref<8x128xf32, #tpu.memory_space<vmem>>, vector<8x128xf32>
    tpu.vector_store %arg8[%c0_17, %c0_18], %21 {strides = array<i32>} : memref<8x128xf32, #tpu.memory_space<vmem>>, vector<8x128xf32>,
    return
  }
  func.func @transform_0(%arg0: i32) -> (i32, i32) {
    %c0_i32 = arith.constant 0 : i32
    %c0_i32_0 = arith.constant 0 : i32
    return %arg0, %c0_i32 : i32, i32
  }
  func.func @transform_1(%arg0: i32) -> (i32, i32) {
    %c0_i32 = arith.constant 0 : i32
    %c0_i32_0 = arith.constant 0 : i32
    %c0_i32_1 = arith.constant 0 : i32
    return %c0_i32, %c0_i32_0 : i32, i32
  }
  func.func @transform_2(%arg0: i32) -> (i32, i32) {
    %c0_i32 = arith.constant 0 : i32
    %c0_i32_0 = arith.constant 0 : i32
    %c0_i32_1 = arith.constant 0 : i32
    return %c0_i32, %c0_i32_0 : i32, i32
  }
  func.func @transform_3(%arg0: i32) -> (i32, i32) {
    %c0_i32 = arith.constant 0 : i32
    %c0_i32_0 = arith.constant 0 : i32
    %c0_i32_1 = arith.constant 0 : i32
    return %c0_i32, %c0_i32_0 : i32, i32
  }
  func.func @transform_4(%arg0: i32) -> (i32, i32) {
    %c0_i32 = arith.constant 0 : i32
    %c0_i32_0 = arith.constant 0 : i32
    %c0_i32_1 = arith.constant 0 : i32
    return %c0_i32, %c0_i32_0 : i32, i32
  }
  func.func @transform_5(%arg0: i32) -> (i32, i32) {
    %c0_i32 = arith.constant 0 : i32
    %c0_i32_0 = arith.constant 0 : i32
    %c0_i32_1 = arith.constant 0 : i32
    return %c0_i32, %c0_i32_0 : i32, i32
  }
  func.func @transform_6(%arg0: i32) -> (i32, i32) {
    %c0_i32 = arith.constant 0 : i32
    %c0_i32_0 = arith.constant 0 : i32
    %c0_i32_1 = arith.constant 0 : i32
    return %c0_i32, %c0_i32_0 : i32, i32
  }
  func.func @transform_7(%arg0: i32) -> (i32, i32) {
    %c0_i32 = arith.constant 0 : i32
    %c0_i32_0 = arith.constant 0 : i32
    return %arg0, %c0_i32 : i32, i32
  }
}

</mosaic_0001>

<llo_original>
// kernel: actor_forward.1
$region0: #{actor_forward.1}
  #allocation0 [shape = 'u32[]', space=smem, size = 0x4, offset = 0x4, fixed_abs, tag = 'smem constant byte address 0x4 - core index']
  #allocation1 [shape = 'u32[144,128]{1,0:T(1,128)}', space=vmem, size = 0x12000, scoped, tag = 'internal scratch']
  %s0 = inlined_call_operand.vmem [shape: bf16[8,16], index: 0, kind: input, shape index: {}]
  %s1 = inlined_call_operand.vmem [shape: bf16[16,32], index: 1, kind: input, shape index: {}]
  %s2 = inlined_call_operand.vmem [shape: f32[1,32], index: 2, kind: input, shape index: {}]
  %s3 = inlined_call_operand.vmem [shape: bf16[32,32], index: 3, kind: input, shape index: {}]
  %s4 = inlined_call_operand.vmem [shape: f32[1,32], index: 4, kind: input, shape index: {}]
  %s5 = inlined_call_operand.vmem [shape: f32[32,128], index: 5, kind: input, shape index: {}]
  %s6 = inlined_call_operand.vmem [shape: f32[1,128], index: 6, kind: input, shape index: {}]
  %s7 = inlined_call_operand.vmem [shape: f32[8,128], index: 7, kind: output, shape index: {}]
  %s8 = sld [smem:[#allocation0]]
  $region38: #{actor_forward.1} parent=0
    _
  %s10 = ssub.s32 1, %s8
  %s11 = scalar_select 0, %s10, %s8
  // Predicated region
  $region2: #{actor_forward.1} parent=0 // pred_check
    _
  $region3: #{actor_forward.1} parent=0 // pred_check_branch
    %13 = sbr.rel (0) target = $region5
  $region4: #{actor_forward.1} parent=0 // pred_region
    _
  $region5: #{actor_forward.1} parent=0 // pred_fallthru
    _
  // Predicated region
  $region6: #{actor_forward.1} parent=0 // pred_check
    _
  $region7: #{actor_forward.1} parent=0 // pred_check_branch
    %15 = sbr.rel (0) target = $region9
  $region8: #{actor_forward.1} parent=0 // pred_region
    _
  $region9: #{actor_forward.1} parent=0 // pred_fallthru
    _
  // Predicated region
  $region10: #{actor_forward.1} parent=0 // pred_check
    _
  $region11: #{actor_forward.1} parent=0 // pred_check_branch
    %17 = sbr.rel (0) target = $region13
  $region12: #{actor_forward.1} parent=0 // pred_region
    _
  $region13: #{actor_forward.1} parent=0 // pred_fallthru
    _
  // Predicated region
  $region14: #{actor_forward.1} parent=0 // pred_check
    _
  $region15: #{actor_forward.1} parent=0 // pred_check_branch
    %19 = sbr.rel (0) target = $region17
  $region16: #{actor_forward.1} parent=0 // pred_region
    _
  $region17: #{actor_forward.1} parent=0 // pred_fallthru
    _
  // Predicated region
  $region18: #{actor_forward.1} parent=0 // pred_check
    _
  $region19: #{actor_forward.1} parent=0 // pred_check_branch
    %21 = sbr.rel (0) target = $region21
  $region20: #{actor_forward.1} parent=0 // pred_region
    _
  $region21: #{actor_forward.1} parent=0 // pred_fallthru
    _
  // Predicated region
  $region22: #{actor_forward.1} parent=0 // pred_check
    _
  $region23: #{actor_forward.1} parent=0 // pred_check_branch
    %23 = sbr.rel (0) target = $region25
  $region24: #{actor_forward.1} parent=0 // pred_region
    _
  $region25: #{actor_forward.1} parent=0 // pred_fallthru
    _
  // Predicated region
  $region26: #{actor_forward.1} parent=0 // pred_check
    _
  $region27: #{actor_forward.1} parent=0 // pred_check_branch
    %25 = sbr.rel (0) target = $region29
  $region28: #{actor_forward.1} parent=0 // pred_region
    _
  $region29: #{actor_forward.1} parent=0 // pred_fallthru
    _
  %v27 = vld [vmem:[%s0] sm:$0xf]
  %v28 = vld [vmem:[%s1] sm:$0xf]
  %v29 = vld [vmem:[%s1 + $0x4] sm:$0xf]
  %v30 = vld [vmem:[%s2] sm:$0x1]
  %v32 = vlaneseq
  %v33 = vshrl.u32 %v32, 7
  %v34 = vsub.s32 0, %v33
  %v35 = vrot.slane %v30, %v34
  %v39 = vunpack.c.l.b16 %v28
  %v40 = vunpack.c.l.b16 %v29
  %v41 = vpack.c.b16 %v40, %v39
  %vm43 = vcmask 130048
  %v45 = vsel %vm43, %v27, 0
  %47 = vmatprep.subr.bf16.mxu0 0
  %48 = vmatpush1.bf16.msra.mxu0 0
  %49 = vmatprep.subr.bf16.mxu0 0
  %50 = vmatpush1.bf16.msra.mxu0 0
  %51 = vmatprep.subr.bf16.mxu0 0
  %52 = vmatpush1.bf16.msra.mxu0 0
  %53 = vmatprep.subr.bf16.mxu0 0
  %54 = vmatpush1.bf16.msra.mxu0 0
  %55 = vmatprep.subr.bf16.mxu0 0
  %56 = vmatpush1.bf16.msra.mxu0 0
  %57 = vmatprep.subr.bf16.mxu0 0
  %58 = vmatpush1.bf16.msra.mxu0 0
  %59 = vmatprep.subr.bf16.mxu0 0
  %60 = vmatpush1.bf16.msra.mxu0 0
  %61 = vmatprep.subr.bf16.mxu0 0
  %62 = vmatpush1.bf16.msra.mxu0 %v41
  %63 = vmatprep.subr.bf16.mxu0 0
  %64 = vmatpush2.bf16.msra.mxu0 0
  %65 = vmatprep.subr.bf16.mxu0 0
  %66 = vmatpush2.bf16.msra.mxu0 0
  %67 = vmatprep.subr.bf16.mxu0 0
  %68 = vmatpush2.bf16.msra.mxu0 0
  %69 = vmatprep.subr.bf16.mxu0 0
  %70 = vmatpush2.bf16.msra.mxu0 0
  %71 = vmatprep.subr.bf16.mxu0 0
  %72 = vmatpush2.bf16.msra.mxu0 0
  %73 = vmatprep.subr.bf16.mxu0 0
  %74 = vmatpush2.bf16.msra.mxu0 0
  %75 = vmatprep.subr.bf16.mxu0 0
  %76 = vmatpush2.bf16.msra.mxu0 0
  %77 = vmatprep.subr.bf16.mxu0 0
  %78 = vmatpush2.bf16.msra.mxu0 0
  %79 = vmatprep.mubr.bf16.mxu0 0
  %80 = vmatmul.mubr.bf16.gmra.mxu0 %v45
  %v81 = vpop.f32.mrf.mxu0
  %v82 = vadd.f32 %v35, %v81
  %v83 = vpop.f32.mrf.mxu0
  %v84 = vpop.f32.mrf.mxu0
  %v85 = vpop.f32.mrf.mxu0
  %86 = vdwg.mxu0
  %v87 = vmax.f32 %v82, 0.0
  %v88 = vpack.c.bf16 %v87, %v87
  %v89 = vld [vmem:[%s3] sm:$0xf]
  %v90 = vld [vmem:[%s3 + $0x4] sm:$0xf]
  %v91 = vld [vmem:[%s3 + $0x8] sm:$0xf]
  %v92 = vld [vmem:[%s3 + $0xc] sm:$0xf]
  %v93 = vld [vmem:[%s4] sm:$0x1]
  %v95 = vlaneseq
  %v96 = vshrl.u32 %v95, 7
  %v97 = vsub.s32 0, %v96
  %v98 = vrot.slane %v93, %v97
  %v104 = vunpack.c.l.b16 %v89
  %v105 = vunpack.c.l.b16 %v90
  %v106 = vunpack.c.l.b16 %v91
  %v107 = vunpack.c.l.b16 %v92
  %v108 = vpack.c.b16 %v105, %v104
  %v109 = vpack.c.b16 %v107, %v106
  %vm112 = vcmask 261120
  %v114 = vsel %vm112, %v88, 0
  %116 = vmatprep.subr.bf16.mxu0 0
  %117 = vmatpush1.bf16.msra.mxu0 0
  %118 = vmatprep.subr.bf16.mxu0 0
  %119 = vmatpush1.bf16.msra.mxu0 0
  %120 = vmatprep.subr.bf16.mxu0 0
  %121 = vmatpush1.bf16.msra.mxu0 0
  %122 = vmatprep.subr.bf16.mxu0 0
  %123 = vmatpush1.bf16.msra.mxu0 0
  %124 = vmatprep.subr.bf16.mxu0 0
  %125 = vmatpush1.bf16.msra.mxu0 0
  %126 = vmatprep.subr.bf16.mxu0 0
  %127 = vmatpush1.bf16.msra.mxu0 0
  %128 = vmatprep.subr.bf16.mxu0 0
  %129 = vmatpush1.bf16.msra.mxu0 %v109
  %130 = vmatprep.subr.bf16.mxu0 0
  %131 = vmatpush1.bf16.msra.mxu0 %v108
  %132 = vmatprep.subr.bf16.mxu0 0
  %133 = vmatpush2.bf16.msra.mxu0 0
  %134 = vmatprep.subr.bf16.mxu0 0
  %135 = vmatpush2.bf16.msra.mxu0 0
  %136 = vmatprep.subr.bf16.mxu0 0
  %137 = vmatpush2.bf16.msra.mxu0 0
  %138 = vmatprep.subr.bf16.mxu0 0
  %139 = vmatpush2.bf16.msra.mxu0 0
  %140 = vmatprep.subr.bf16.mxu0 0
  %141 = vmatpush2.bf16.msra.mxu0 0
  %142 = vmatprep.subr.bf16.mxu0 0
  %143 = vmatpush2.bf16.msra.mxu0 0
  %144 = vmatprep.subr.bf16.mxu0 0
  %145 = vmatpush2.bf16.msra.mxu0 0
  %146 = vmatprep.subr.bf16.mxu0 0
  %147 = vmatpush2.bf16.msra.mxu0 0
  %148 = vmatprep.mubr.bf16.mxu0 0
  %149 = vmatmul.mubr.bf16.gmra.mxu0 %v114
  %v150 = vpop.f32.mrf.mxu0
  %v151 = vadd.f32 %v98, %v150
  %v152 = vpop.f32.mrf.mxu0
  %v153 = vpop.f32.mrf.mxu0
  %v154 = vpop.f32.mrf.mxu0
  %155 = vdwg.mxu0
  %v156 = vmax.f32 %v151, 0.0
  %v157 = vld [vmem:[%s5] sm:$0xff]
  %v158 = vld [vmem:[%s5 + $0x8] sm:$0xff]
  %v159 = vld [vmem:[%s5 + $0x10] sm:$0xff]
  %v160 = vld [vmem:[%s5 + $0x18] sm:$0xff]
  %v161 = vld [vmem:[%s6] sm:$0x1]
  %v163 = vlaneseq
  %v164 = vshrl.u32 %v163, 7
  %v165 = vsub.s32 0, %v164
  %v166 = vrot.slane %v161, %v165
  %v169 = vsel %vm112, %v156, 0
  %171 = vmatprep.subr.mxu0 0.0
  %172 = vmatpush1.msra.mxu0 0.0
  %173 = vmatprep.subr.mxu0 0.0
  %174 = vmatpush1.msra.mxu0 0.0
  %175 = vmatprep.subr.mxu0 0.0
  %176 = vmatpush1.msra.mxu0 0.0
  %177 = vmatprep.subr.mxu0 0.0
  %178 = vmatpush1.msra.mxu0 0.0
  %179 = vmatprep.subr.mxu0 0.0
  %180 = vmatpush1.msra.mxu0 0.0
  %181 = vmatprep.subr.mxu0 0.0
  %182 = vmatpush1.msra.mxu0 0.0
  %183 = vmatprep.subr.mxu0 0.0
  %184 = vmatpush1.msra.mxu0 0.0
  %185 = vmatprep.subr.mxu0 0.0
  %186 = vmatpush1.msra.mxu0 0.0
  %187 = vmatprep.subr.mxu0 0.0
  %188 = vmatpush1.msra.mxu0 0.0
  %189 = vmatprep.subr.mxu0 0.0
  %190 = vmatpush1.msra.mxu0 0.0
  %191 = vmatprep.subr.mxu0 0.0
  %192 = vmatpush1.msra.mxu0 0.0
  %193 = vmatprep.subr.mxu0 0.0
  %194 = vmatpush1.msra.mxu0 0.0
  %195 = vmatprep.subr.mxu0 0.0
  %196 = vmatpush1.msra.mxu0 %v160
  %197 = vmatprep.subr.mxu0 0.0
  %198 = vmatpush1.msra.mxu0 %v159
  %199 = vmatprep.subr.mxu0 0.0
  %200 = vmatpush1.msra.mxu0 %v158
  %201 = vmatprep.subr.mxu0 0.0
  %202 = vmatpush1.msra.mxu0 %v157
  %203 = vmatprep.subr.mxu0 0.0
  %204 = vmatpush2.msra.mxu0 0.0
  %205 = vmatprep.subr.mxu0 0.0
  %206 = vmatpush2.msra.mxu0 0.0
  %207 = vmatprep.subr.mxu0 0.0
  %208 = vmatpush2.msra.mxu0 0.0
  %209 = vmatprep.subr.mxu0 0.0
  %210 = vmatpush2.msra.mxu0 0.0
  %211 = vmatprep.subr.mxu0 0.0
  %212 = vmatpush2.msra.mxu0 0.0
  %213 = vmatprep.subr.mxu0 0.0
  %214 = vmatpush2.msra.mxu0 0.0
  %215 = vmatprep.subr.mxu0 0.0
  %216 = vmatpush2.msra.mxu0 0.0
  %217 = vmatprep.subr.mxu0 0.0
  %218 = vmatpush2.msra.mxu0 0.0
  %219 = vmatprep.subr.mxu0 0.0
  %220 = vmatpush2.msra.mxu0 0.0
  %221 = vmatprep.subr.mxu0 0.0
  %222 = vmatpush2.msra.mxu0 0.0
  %223 = vmatprep.subr.mxu0 0.0
  %224 = vmatpush2.msra.mxu0 0.0
  %225 = vmatprep.subr.mxu0 0.0
  %226 = vmatpush2.msra.mxu0 0.0
  %227 = vmatprep.subr.mxu0 0.0
  %228 = vmatpush2.msra.mxu0 0.0
  %229 = vmatprep.subr.mxu0 0.0
  %230 = vmatpush2.msra.mxu0 0.0
  %231 = vmatprep.subr.mxu0 0.0
  %232 = vmatpush2.msra.mxu0 0.0
  %233 = vmatprep.subr.mxu0 0.0
  %234 = vmatpush2.msra.mxu0 0.0
  %235 = vmatprep.mubr.f32.mxu0 0.0
  %236 = vmatmul.mubr.f32.gmra.mxu0 %v169
  %v237 = vpop.f32.mrf.mxu0
  %v238 = vadd.f32 %v166, %v237
  %v239 = vpop.f32.mrf.mxu0
  %240 = vdwg.mxu0
  %v241 = vtanh.pop %v238
  %242 = vst [vmem:[%s7] sm:$0xff] %v241
  // Predicated region
  $region30: #{actor_forward.1} parent=0 // pred_check
    _
  $region31: #{actor_forward.1} parent=0 // pred_check_branch
    %244 = sbr.rel (0) target = $region33
  $region32: #{actor_forward.1} parent=0 // pred_region
    _
  $region33: #{actor_forward.1} parent=0 // pred_fallthru
    _
  // Predicated region
  $region34: #{actor_forward.1} parent=0 // pred_check
    _
  $region35: #{actor_forward.1} parent=0 // pred_check_branch
    %246 = sbr.rel (0) target = $region37
  $region36: #{actor_forward.1} parent=0 // pred_region
    _
  $region37: #{actor_forward.1} parent=0 // pred_fallthru
    _

</llo_original>
